<compile_context>
chip_gen: v6e
topology: v6e:2x2x1
jax: 0.10.0
libtpu: 0.0.40
codegen_flags: <defaults>
</compile_context>

<pallas_src>
import math

import jax
import jax.numpy as jnp
from jax import lax
from jax.experimental import pallas as pl
from jax.experimental.pallas import tpu as pltpu


# Tile caps (re-derived so double-buffered blocks stay far below v7x's 64 MiB
# physical / 32 MiB scoped VMEM and v5e's 16 MiB scoped default).
_TM_CAP = 256          # rows (M = N*T) per tile in the linear kernels
_TN_CAP = 256          # output columns per tile in the linear kernels
_TK_CAP = 512          # contraction dim per tile in the linear kernels
_TQ_CAP = 256          # query rows per flash-attention tile
_TKV_CAP = 512         # key/value rows per flash-attention tile
_VMEM_LIMIT = 32 * 1024 * 1024


def _pick_tile(dim, cap, align):
    """Largest tile <= cap that divides `dim` and is a multiple of `align`.

    Falls back to the full extent (block == array dim, always legal) when no
    aligned divisor exists.
    """
    if dim <= cap:
        return dim
    t = (cap // align) * align
    while t >= align:
        if dim % t == 0:
            return t
        t -= align
    # TODO(synk): pre-pad awkward (prime-ish) dims instead of falling back to an
    # untiled full extent.
    return dim


# ------------------------------ generic linear ------------------------------

def _linear_kernel(x_ref, w_ref, b_ref, o_ref, acc_ref):
    kk = pl.program_id(2)

    @pl.when(kk == 0)
    def _init():
        # Fold the bias into the accumulator init (saves the finalize-time VPU add).
        acc_ref[...] = jnp.broadcast_to(b_ref[...].astype(jnp.float32), acc_ref.shape)

    acc_ref[...] += jnp.dot(x_ref[...], w_ref[...], preferred_element_type=jnp.float32)

    @pl.when(kk == pl.num_programs(2) - 1)
    def _fin():
        o_ref[...] = acc_ref[...].astype(o_ref.dtype)


def linear(x2d, w, b):
    """y = x2d @ w + b, tiled over (M, N-out, K) with a pipelined f32 accumulator."""
    M, K = x2d.shape
    O = w.shape[1]
    tm = _pick_tile(M, _TM_CAP, 8)
    tk = _pick_tile(K, _TK_CAP, 128)
    tn = _pick_tile(O, _TN_CAP, 128)
    grid = (M // tm, O // tn, K // tk)
    b2d = b.reshape(1, O).astype(jnp.float32)
    itemsize = jnp.dtype(x2d.dtype).itemsize
    cost = pl.CostEstimate(
        flops=2 * M * K * O,
        transcendentals=0,
        bytes_accessed=int(itemsize * (M * K + K * O + M * O)))
    return pl.pallas_call(
        _linear_kernel,
        out_shape=jax.ShapeDtypeStruct((M, O), x2d.dtype),
        grid=grid,
        in_specs=[
            pl.BlockSpec((tm, tk), lambda i, j, kk: (i, kk)),
            # TODO(synk): consider pipeline_mode=pl.Buffered(3) on the weight stream
            # once the tn-tiled weight DMAs become latency-bound on v5e/v6e.
            pl.BlockSpec((tk, tn), lambda i, j, kk: (kk, j)),
            pl.BlockSpec((1, tn), lambda i, j, kk: (0, j)),
        ],
        out_specs=pl.BlockSpec((tm, tn), lambda i, j, kk: (i, j)),
        scratch_shapes=[pltpu.VMEM((tm, tn), jnp.float32)],
        compiler_params=pltpu.CompilerParams(
            dimension_semantics=("parallel", "parallel", "arbitrary"),
            vmem_limit_bytes=_VMEM_LIMIT),
        cost_estimate=cost,
    )(x2d, w, b2d)


# --------------------------- flash attention kernel --------------------------

def _flash_attn_kernel(q_ref, k_ref, v_ref, mask_ref, o_ref, m_sc, l_sc, acc_sc):
    ki = pl.program_id(3)

    @pl.when(ki == 0)
    def _init():
        m_sc[...] = jnp.full(m_sc.shape, -jnp.inf, dtype=m_sc.dtype)
        l_sc[...] = jnp.zeros_like(l_sc)
        acc_sc[...] = jnp.zeros_like(acc_sc)

    # bf16 operands -> bf16 MXU path on v5e/v6e/v7x; accumulation stays in f32.
    # q is already pre-scaled by 1/sqrt(d_k) (folded into wq/bq at setup).
    q = q_ref[0, 0].astype(jnp.bfloat16)                     # (tq, dk)
    k = k_ref[0, 0].astype(jnp.bfloat16)                     # (tkv, dk)
    s = lax.dot_general(q, k, (((1,), (1,)), ((), ())),
                        preferred_element_type=jnp.float32)  # (tq, tkv)

    keep = mask_ref[0] != 0                                  # (1, tkv), masks keys
    # Finite fill (not -inf): fully-masked rows yield a uniform distribution
    # instead of PyTorch's NaN (documented divergence); never produces NaN.
    s = jnp.where(keep, s, jnp.float32(-1e30))

    m_prev = m_sc[...]                                       # (tq, 1)
    m_new = jnp.maximum(m_prev, jnp.max(s, axis=-1, keepdims=True))
    alpha = jnp.exp(m_prev - m_new)                          # EUP exp
    p = jnp.exp(s - m_new)                                   # (tq, tkv)
    l_sc[...] = alpha * l_sc[...] + jnp.sum(p, axis=-1, keepdims=True)
    pv = jnp.dot(p.astype(jnp.bfloat16), v_ref[0, 0].astype(jnp.bfloat16),
                 preferred_element_type=jnp.float32)         # (tq, dk)
    acc_sc[...] = alpha * acc_sc[...] + pv
    m_sc[...] = m_new

    @pl.when(ki == pl.num_programs(3) - 1)
    def _fin():
        inv = pl.reciprocal(l_sc[...], approx=True)          # EUP approx reciprocal
        o_ref[0, 0] = (acc_sc[...] * inv).astype(o_ref.dtype)


def flash_attention(qh, kh, vh, mask_i32):
    """qh/kh/vh: (N, H, T, d_k) with 1/sqrt(d_k) folded into qh; mask: (N, T) int32.

    Returns the per-head attention output, shape (N, H, T, d_k).
    """
    N, H, Tq, dk = qh.shape
    Tk = kh.shape[2]
    tq = _pick_tile(Tq, _TQ_CAP, 8)
    tkv = _pick_tile(Tk, _TKV_CAP, 8)
    mask3 = mask_i32.reshape(N, 1, Tk)
    grid = (N, H, Tq // tq, Tk // tkv)
    itemsize = jnp.dtype(qh.dtype).itemsize
    cost = pl.CostEstimate(
        flops=4 * N * H * Tq * Tk * dk,
        transcendentals=N * H * Tq * Tk,
        bytes_accessed=int(itemsize * N * H * (2 * Tq * dk + 2 * Tk * dk)))
    return pl.pallas_call(
        _flash_attn_kernel,
        out_shape=jax.ShapeDtypeStruct((N, H, Tq, dk), qh.dtype),
        grid=grid,
        in_specs=[
            pl.BlockSpec((1, 1, tq, dk), lambda n, h, qi, ki: (n, h, qi, 0)),
            pl.BlockSpec((1, 1, tkv, dk), lambda n, h, qi, ki: (n, h, ki, 0)),
            pl.BlockSpec((1, 1, tkv, dk), lambda n, h, qi, ki: (n, h, ki, 0)),
            pl.BlockSpec((1, 1, tkv), lambda n, h, qi, ki: (n, 0, ki)),
        ],
        out_specs=pl.BlockSpec((1, 1, tq, dk), lambda n, h, qi, ki: (n, h, qi, 0)),
        scratch_shapes=[pltpu.VMEM((tq, 1), jnp.float32),    # running max
                        pltpu.VMEM((tq, 1), jnp.float32),    # running denominator
                        pltpu.VMEM((tq, dk), jnp.float32)],  # output accumulator
        compiler_params=pltpu.CompilerParams(
            dimension_semantics=("parallel", "parallel", "parallel", "arbitrary"),
            vmem_limit_bytes=_VMEM_LIMIT),
        cost_estimate=cost,
    )(qh, kh, vh, mask3)


# --------------------------- module forward pass ----------------------------

class MultiHeadAttentionParams:
    """Deterministically initialized parameters matching the PyTorch module."""

    def __init__(self, d_k, d_model, n_heads, key):
        self.d_k = d_k
        self.d_model = d_model
        self.n_heads = n_heads
        d_out = d_k * n_heads
        keys = jax.random.split(key, 8)

        def init_linear(kw, kb, fan_in, fan_out):
            bound = 1.0 / math.sqrt(fan_in)          # nn.Linear default init
            w = jax.random.uniform(kw, (fan_in, fan_out), jnp.float32, -bound, bound)
            b = jax.random.uniform(kb, (fan_out,), jnp.float32, -bound, bound)
            return w, b

        self.wq, self.bq = init_linear(keys[0], keys[1], d_model, d_out)
        self.wk, self.bk = init_linear(keys[2], keys[3], d_model, d_out)
        self.wv, self.bv = init_linear(keys[4], keys[5], d_model, d_out)
        self.wo, self.bo = init_linear(keys[6], keys[7], d_out, d_model)

        # One-time parameter transforms (not per-call wrapper ops):
        #  * fold 1/sqrt(d_k) into the query projection,
        #  * concatenated weights for the fused self-attention / fused K-V paths.
        scale = 1.0 / math.sqrt(d_k)
        self.wq_s = self.wq * scale
        self.bq_s = self.bq * scale
        self.w_qkv = jnp.concatenate([self.wq_s, self.wk, self.wv], axis=1)
        self.b_qkv = jnp.concatenate([self.bq_s, self.bk, self.bv])
        self.w_kv = jnp.concatenate([self.wk, self.wv], axis=1)
        self.b_kv = jnp.concatenate([self.bk, self.bv])


def _split_heads(x2d, N, T, H, dk):
    # (N*T, H*dk) -> (N, H, T, dk).  One XLA transpose; keeps every attention
    # block's last dim equal to the full array extent (legal for any d_k).
    return x2d.reshape(N, T, H, dk).transpose(0, 2, 1, 3)


def multi_head_attention(params, q, k, v, mask=None):
    """Forward pass. q, k, v: (N, T, d_model). mask: (N, T) or None (1 = attend)."""
    N, T, d_model = q.shape
    H, dk = params.n_heads, params.d_k
    D = H * dk
    M = N * T

    if q is k and k is v:
        # Self-attention: ONE matmul against the concatenated (d_model, 3D) weight.
        qkv = linear(q.reshape(M, d_model), params.w_qkv, params.b_qkv)
        qp, kp, vp = qkv[:, :D], qkv[:, D:2 * D], qkv[:, 2 * D:]
    else:
        qp = linear(q.reshape(M, d_model), params.wq_s, params.bq_s)
        if k is v:
            kv = linear(k.reshape(M, d_model), params.w_kv, params.b_kv)
            kp, vp = kv[:, :D], kv[:, D:]
        else:
            kp = linear(k.reshape(M, d_model), params.wk, params.bk)
            vp = linear(v.reshape(M, d_model), params.wv, params.bv)

    qh = _split_heads(qp, N, T, H, dk)
    kh = _split_heads(kp, N, T, H, dk)
    vh = _split_heads(vp, N, T, H, dk)

    if mask is None:
        mask_i = jnp.ones((N, T), jnp.int32)
    else:
        mask_i = (mask != 0).astype(jnp.int32)

    ah = flash_attention(qh, kh, vh, mask_i)          # (N, H, T, dk)
    # TODO(synk): fold this head-merge transpose into the output projection by
    # making the head axis a K-reduction grid axis of the fc kernel.
    a2d = ah.transpose(0, 2, 1, 3).reshape(M, D)

    out = linear(a2d, params.wo, params.bo)
    return out.reshape(N, T, d_model)


# ----------------------------- pure-JAX reference ---------------------------

def reference(params, q, k, v, mask=None):
    N, T, d_model = q.shape
    H, dk = params.n_heads, params.d_k
    qp = q @ params.wq + params.bq
    kp = k @ params.wk + params.bk
    vp = v @ params.wv + params.bv
    qh = qp.reshape(N, T, H, dk).transpose(0, 2, 1, 3)
    kh = kp.reshape(N, T, H, dk).transpose(0, 2, 1, 3)
    vh = vp.reshape(N, T, H, dk).transpose(0, 2, 1, 3)
    s = jnp.einsum("nhqd,nhkd->nhqk", qh, kh) / math.sqrt(dk)
    if mask is not None:
        s = jnp.where(mask[:, None, None, :] == 0, -jnp.inf, s)
    w = jax.nn.softmax(s, axis=-1)
    a = jnp.einsum("nhqk,nhkd->nhqd", w, vh)
    a = a.transpose(0, 2, 1, 3).reshape(N, T, H * dk)
    return a @ params.wo + params.bo


if __name__ == "__main__":
    N, T, d_model = 2, 8, 32
    n_heads, d_k = 4, 8

    root = jax.random.PRNGKey(0)
    kparams, kx, kq, kk, kv, kmask = jax.random.split(root, 6)

    params = MultiHeadAttentionParams(d_k, d_model, n_heads, kparams)
    x = jax.random.normal(kx, (N, T, d_model), jnp.float32)
    q = jax.random.normal(kq, (N, T, d_model), jnp.float32)
    k = jax.random.normal(kk, (N, T, d_model), jnp.float32)
    v = jax.random.normal(kv, (N, T, d_model), jnp.float32)
    # mask: 1 = attend, 0 = masked (matches PyTorch masked_fill(mask == 0, -inf)).
    mask = (jax.random.uniform(kmask, (N, T)) > 0.2).astype(jnp.int32)
    mask = mask.at[:, 0].set(1)   # keep at least one valid key per batch row

    # Tolerance covers the bf16 MXU casts inside the attention kernel and the EUP
    # approximate reciprocal used for the softmax normalization.
    atol, rtol = 2e-2, 2e-2

    # Self-attention path (fused single-matmul QKV projection).
    out_self = jax.block_until_ready(multi_head_attention(params, x, x, x, mask))
    ref_self = reference(params, x, x, x, mask)
    assert out_self.shape == (N, T, d_model)
    assert jnp.allclose(out_self, ref_self, atol=atol, rtol=rtol), \
        "self-attention mismatch vs reference"

    # Cross-attention path (separate q / k / v projections).
    out_cross = jax.block_until_ready(multi_head_attention(params, q, k, v, mask))
    ref_cross = reference(params, q, k, v, mask)
    assert out_cross.shape == (N, T, d_model)
    assert jnp.allclose(out_cross, ref_cross, atol=atol, rtol=rtol), \
        "cross-attention mismatch vs reference"

    print("KERNEL_OK")
</pallas_src>

<mosaic_0001>
module attributes {stable_mosaic.version = 11 : i64} {
  func.func @_linear_kernel(%arg0: i32, %arg1: i32, %arg2: i32, %arg3: memref<16x32xf32, #tpu.memory_space<vmem>>, %arg4: memref<32x96xf32, #tpu.memory_space<vmem>>, %arg5: memref<1x96xf32, #tpu.memory_space<vmem>>, %arg6: memref<16x96xf32, #tpu.memory_space<vmem>>, %arg7: memref<16x96xf32, #tpu.memory_space<vmem>>) attributes {dimension_semantics = [#tpu.dimension_semantics<parallel>, #tpu.dimension_semantics<parallel>, #tpu.dimension_semantics<arbitrary>], iteration_bounds = array<i64: 1, 1, 1>, scalar_prefetch = 0 : i64, scratch_operands = 1 : i64, tpu.core_type = #tpu.core_type<tc>, window_params = [{transform_indices = @transform_0, window_bounds = array<i64: 16, 32>}, {transform_indices = @transform_1, window_bounds = array<i64: 32, 96>}, {transform_indices = @transform_2, window_bounds = array<i64: 1, 96>}, {transform_indices = @transform_3, window_bounds = array<i64: 16, 96>}]} {
    %c0_i32 = arith.constant 0 : i32
    %0 = arith.cmpi eq, %arg2, %c0_i32 : i32
    %1 = arith.extui %0 : i1 to i32
    %c0_i32_0 = arith.constant 0 : i32
    %2 = arith.cmpi ne, %1, %c0_i32_0 : i32
    scf.if %2 {
      %c0_10 = arith.constant 0 : index
      %c0_11 = arith.constant 0 : index
      %12 = vector.load %arg5[%c0_10, %c0_11] : memref<1x96xf32, #tpu.memory_space<vmem>>, vector<1x96xf32>
      %13 = vector.shape_cast %12 : vector<1x96xf32> to vector<1x96xf32>
      %14 = vector.broadcast %13 : vector<1x96xf32> to vector<16x96xf32>
      %c0_12 = arith.constant 0 : index
      %c0_13 = arith.constant 0 : index
      %15 = vector.load %arg7[%c0_12, %c0_13] : memref<16x96xf32, #tpu.memory_space<vmem>>, vector<16x96xf32>
      tpu.vector_store %arg7[%c0_12, %c0_13], %14 {strides = array<i32>} : memref<16x96xf32, #tpu.memory_space<vmem>>, vector<16x96xf32>,
    } else {
    }
    %c0 = arith.constant 0 : index
    %c0_1 = arith.constant 0 : index
    %3 = vector.load %arg7[%c0, %c0_1] : memref<16x96xf32, #tpu.memory_space<vmem>>, vector<16x96xf32>
    %c0_2 = arith.constant 0 : index
    %c0_3 = arith.constant 0 : index
    %4 = vector.load %arg3[%c0_2, %c0_3] : memref<16x32xf32, #tpu.memory_space<vmem>>, vector<16x32xf32>
    %c0_4 = arith.constant 0 : index
    %c0_5 = arith.constant 0 : index
    %5 = vector.load %arg4[%c0_4, %c0_5] : memref<32x96xf32, #tpu.memory_space<vmem>>, vector<32x96xf32>
    %cst = arith.constant dense<0.000000e+00> : vector<16x96xf32>
    %6 = tpu.matmul %4, %5, %cst {dimension_numbers = #tpu.dot_dimension_numbers<[1], [0], [0], [1], [0, 0, 1, 1], [], []>} : vector<16x32xf32>, vector<32x96xf32>, vector<16x96xf32> -> vector<16x96xf32>
    %7 = arith.addf %3, %6 : vector<16x96xf32>
    %c0_6 = arith.constant 0 : index
    %c0_7 = arith.constant 0 : index
    %8 = vector.load %arg7[%c0_6, %c0_7] : memref<16x96xf32, #tpu.memory_space<vmem>>, vector<16x96xf32>
    tpu.vector_store %arg7[%c0_6, %c0_7], %7 {strides = array<i32>} : memref<16x96xf32, #tpu.memory_space<vmem>>, vector<16x96xf32>,
    %c0_i32_8 = arith.constant 0 : i32
    %9 = arith.cmpi eq, %arg2, %c0_i32_8 : i32
    %10 = arith.extui %9 : i1 to i32
    %c0_i32_9 = arith.constant 0 : i32
    %11 = arith.cmpi ne, %10, %c0_i32_9 : i32
    scf.if %11 {
      %c0_10 = arith.constant 0 : index
      %c0_11 = arith.constant 0 : index
      %12 = vector.load %arg7[%c0_10, %c0_11] : memref<16x96xf32, #tpu.memory_space<vmem>>, vector<16x96xf32>
      %c0_12 = arith.constant 0 : index
      %c0_13 = arith.constant 0 : index
      %13 = vector.load %arg6[%c0_12, %c0_13] : memref<16x96xf32, #tpu.memory_space<vmem>>, vector<16x96xf32>
      tpu.vector_store %arg6[%c0_12, %c0_13], %12 {strides = array<i32>} : memref<16x96xf32, #tpu.memory_space<vmem>>, vector<16x96xf32>,
    } else {
    }
    return
  }
  func.func @transform_0(%arg0: i32, %arg1: i32, %arg2: i32) -> (i32, i32) {
    %c0_i32 = arith.constant 0 : i32
    return %arg0, %arg2 : i32, i32
  }
  func.func @transform_1(%arg0: i32, %arg1: i32, %arg2: i32) -> (i32, i32) {
    %c0_i32 = arith.constant 0 : i32
    return %arg2, %arg1 : i32, i32
  }
  func.func @transform_2(%arg0: i32, %arg1: i32, %arg2: i32) -> (i32, i32) {
    %c0_i32 = arith.constant 0 : i32
    %c0_i32_0 = arith.constant 0 : i32
    return %c0_i32, %arg1 : i32, i32
  }
  func.func @transform_3(%arg0: i32, %arg1: i32, %arg2: i32) -> (i32, i32) {
    %c0_i32 = arith.constant 0 : i32
    return %arg0, %arg1 : i32, i32
  }
}

</mosaic_0001>

<llo_original>
// kernel: tpu_custom_call.1
$region0: #{tpu_custom_call.1}
  #allocation0 [shape = 'u32[]', space=smem, size = 0x4, offset = 0x4, fixed_abs, tag = 'smem constant byte address 0x4 - core index']
  #allocation1 [shape = 'u32[144,128]{1,0:T(1,128)}', space=vmem, size = 0x12000, scoped, tag = 'internal scratch']
  #allocation2 [shape = 'f32[16,96]{1,0:T(8,128)}', space=vmem, size = 0x2000, scoped, tag = 'scratch operand']
  %s0 = inlined_call_operand.hbm [shape: f32[16,32], index: 0, kind: input, shape index: {}]
  %s1 = inlined_call_operand.hbm [shape: f32[32,96], index: 1, kind: input, shape index: {}]
  %s2 = inlined_call_operand.vmem [shape: f32[1,96], index: 2, kind: input, shape index: {}]
  %s3 = inlined_call_operand.hbm [shape: f32[16,96], index: 3, kind: output, shape index: {}]
  %s4 = sld [smem:[#allocation0]]
  $region38: #{tpu_custom_call.1} parent=0
    _
  %s6 = ssub.s32 1, %s4
  %s7 = scalar_select 0, %s6, %s4
  $region1: #{tpu_custom_call.1} parent=0
    #allocation3 [shape = 'u8[8192]{0}', space=vmem, size = 0x2000, scoped, tag = 'input window, operand 0, single buffered']
    #allocation4 [shape = 's32[1]{0}', space=sflag, size = 0x4, scoped, tag = 'scoped memory for tpu_custom_call.1']
    #allocation5 [shape = 's32[1]{0}', space=sflag, size = 0x4, scoped, tag = 'scoped memory for tpu_custom_call.1']
    #allocation6 [shape = 'u8[16384]{0}', space=vmem, size = 0x4000, scoped, tag = 'input window, operand 1, single buffered']
    #allocation7 [shape = 's32[1]{0}', space=sflag, size = 0x4, scoped, tag = 'scoped memory for tpu_custom_call.1']
    #allocation8 [shape = 'u8[8192]{0}', space=vmem, size = 0x2000, scoped, tag = 'output window, operand 0, single buffered']
    %8 = vsyncpa [#allocation4], 0
    %9 = vsyncpa [#allocation7], 0
    %10 = vsyncpa [#allocation5], 0
    // Predicated region
    $region2: #{tpu_custom_call.1} parent=1 // pred_check
      _
    $region3: #{tpu_custom_call.1} parent=1 // pred_check_branch
      %12 = sbr.rel (0) target = $region5
    $region4: #{tpu_custom_call.1} parent=1 // pred_region
      %s14 = ssub.s32 256, 256
      %15 = vsyncadd [#allocation4], %s14
      %s16 = sshll.u32 [#allocation3], 4
      %s17 = int_to_ptr.vmem [resolvable:$true] %s16
      %22 = dma.hbm_to_vmem [thread:$0]  %s0, 256, %s17, [#allocation4], 128, 128, 8
    $region5: #{tpu_custom_call.1} parent=1 // pred_fallthru
      _
    // Predicated region
    $region6: #{tpu_custom_call.1} parent=1 // pred_check
      _
    $region7: #{tpu_custom_call.1} parent=1 // pred_check_branch
      %24 = sbr.rel (0) target = $region9
    $region8: #{tpu_custom_call.1} parent=1 // pred_region
      %s26 = ssub.s32 512, 512
      %27 = vsyncadd [#allocation7], %s26
      %s28 = sshll.u32 [#allocation6], 4
      %s29 = int_to_ptr.vmem [resolvable:$true] %s28
      %34 = dma.hbm_to_vmem [thread:$0]  %s1, 512, %s29, [#allocation7], 128, 128, 8
    $region9: #{tpu_custom_call.1} parent=1 // pred_fallthru
      _
    // Predicated region
    $region10: #{tpu_custom_call.1} parent=1 // pred_check
      _
    $region11: #{tpu_custom_call.1} parent=1 // pred_check_branch
      %36 = sbr.rel (0) target = $region13
    $region12: #{tpu_custom_call.1} parent=1 // pred_region
      _
    $region13: #{tpu_custom_call.1} parent=1 // pred_fallthru
      _
    // Predicated region
    $region14: #{tpu_custom_call.1} parent=1 // pred_check
      _
    $region15: #{tpu_custom_call.1} parent=1 // pred_check_branch
      %38 = sbr.rel (0) target = $region17
    $region16: #{tpu_custom_call.1} parent=1 // pred_region
      %39 = dma.done [#allocation4], 256
    $region17: #{tpu_custom_call.1} parent=1 // pred_fallthru
      _
    // Predicated region
    $region18: #{tpu_custom_call.1} parent=1 // pred_check
      _
    $region19: #{tpu_custom_call.1} parent=1 // pred_check_branch
      %41 = sbr.rel (0) target = $region21
    $region20: #{tpu_custom_call.1} parent=1 // pred_region
      %42 = dma.done [#allocation7], 512
    $region21: #{tpu_custom_call.1} parent=1 // pred_fallthru
      _
    %p43 = scmp.eq.s32.totalorder 0, 0
    // Predicated region
    $region22: #{tpu_custom_call.1} parent=1 // pred_check
      %p44 = pneg %p43
    $region23: #{tpu_custom_call.1} parent=1 // pred_check_branch
      %46 = sbr.rel (%p44) target = $region25
    $region24: #{tpu_custom_call.1} parent=1 // pred_region
      %v47 = vld [vmem:[%s2] sm:$0x1]
      %v49 = vlaneseq
      %v50 = vshrl.u32 %v49, 7
      %v51 = vsub.s32 0, %v50
      %v52 = vrot.slane %v47, %v51
      %vm54 = vcmask 785408
      %55 = vst.msk [vmem:[#allocation2] sm:$0xff] %vm54, %v52
      %56 = vst.msk [vmem:[#allocation2 + $0x8] sm:$0xff] %vm54, %v52
    $region25: #{tpu_custom_call.1} parent=1 // pred_fallthru
      _
    %v57 = vld [vmem:[#allocation2] sm:$0xff]
    %v58 = vld [vmem:[#allocation2 + $0x8] sm:$0xff]
    %v59 = vld [vmem:[#allocation3] sm:$0xff]
    %v60 = vld [vmem:[#allocation3 + $0x8] sm:$0xff]
    %v61 = vld [vmem:[#allocation6] sm:$0xff]
    %v62 = vld [vmem:[#allocation6 + $0x8] sm:$0xff]
    %v63 = vld [vmem:[#allocation6 + $0x10] sm:$0xff]
    %v64 = vld [vmem:[#allocation6 + $0x18] sm:$0xff]
    %vm65 = vcmask 261120
    %v67 = vsel %vm65, %v59, 0
    %v70 = vsel %vm65, %v60, 0
    %72 = vmatprep.subr.mxu0 0.0
    %73 = vmatpush1.msra.mxu0 0.0
    %74 = vmatprep.subr.mxu0 0.0
    %75 = vmatpush1.msra.mxu0 0.0
    %76 = vmatprep.subr.mxu0 0.0
    %77 = vmatpush1.msra.mxu0 0.0
    %78 = vmatprep.subr.mxu0 0.0
    %79 = vmatpush1.msra.mxu0 0.0
    %80 = vmatprep.subr.mxu0 0.0
    %81 = vmatpush1.msra.mxu0 0.0
    %82 = vmatprep.subr.mxu0 0.0
    %83 = vmatpush1.msra.mxu0 0.0
    %84 = vmatprep.subr.mxu0 0.0
    %85 = vmatpush1.msra.mxu0 0.0
    %86 = vmatprep.subr.mxu0 0.0
    %87 = vmatpush1.msra.mxu0 0.0
    %88 = vmatprep.subr.mxu0 0.0
    %89 = vmatpush1.msra.mxu0 0.0
    %90 = vmatprep.subr.mxu0 0.0
    %91 = vmatpush1.msra.mxu0 0.0
    %92 = vmatprep.subr.mxu0 0.0
    %93 = vmatpush1.msra.mxu0 0.0
    %94 = vmatprep.subr.mxu0 0.0
    %95 = vmatpush1.msra.mxu0 0.0
    %96 = vmatprep.subr.mxu0 0.0
    %97 = vmatpush1.msra.mxu0 %v64
    %98 = vmatprep.subr.mxu0 0.0
    %99 = vmatpush1.msra.mxu0 %v63
    %100 = vmatprep.subr.mxu0 0.0
    %101 = vmatpush1.msra.mxu0 %v62
    %102 = vmatprep.subr.mxu0 0.0
    %103 = vmatpush1.msra.mxu0 %v61
    %104 = vmatprep.subr.mxu0 0.0
    %105 = vmatpush2.msra.mxu0 0.0
    %106 = vmatprep.subr.mxu0 0.0
    %107 = vmatpush2.msra.mxu0 0.0
    %108 = vmatprep.subr.mxu0 0.0
    %109 = vmatpush2.msra.mxu0 0.0
    %110 = vmatprep.subr.mxu0 0.0
    %111 = vmatpush2.msra.mxu0 0.0
    %112 = vmatprep.subr.mxu0 0.0
    %113 = vmatpush2.msra.mxu0 0.0
    %114 = vmatprep.subr.mxu0 0.0
    %115 = vmatpush2.msra.mxu0 0.0
    %116 = vmatprep.subr.mxu0 0.0
    %117 = vmatpush2.msra.mxu0 0.0
    %118 = vmatprep.subr.mxu0 0.0
    %119 = vmatpush2.msra.mxu0 0.0
    %120 = vmatprep.subr.mxu0 0.0
    %121 = vmatpush2.msra.mxu0 0.0
    %122 = vmatprep.subr.mxu0 0.0
    %123 = vmatpush2.msra.mxu0 0.0
    %124 = vmatprep.subr.mxu0 0.0
    %125 = vmatpush2.msra.mxu0 0.0
    %126 = vmatprep.subr.mxu0 0.0
    %127 = vmatpush2.msra.mxu0 0.0
    %128 = vmatprep.subr.mxu0 0.0
    %129 = vmatpush2.msra.mxu0 0.0
    %130 = vmatprep.subr.mxu0 0.0
    %131 = vmatpush2.msra.mxu0 0.0
    %132 = vmatprep.subr.mxu0 0.0
    %133 = vmatpush2.msra.mxu0 0.0
    %134 = vmatprep.subr.mxu0 0.0
    %135 = vmatpush2.msra.mxu0 0.0
    %136 = vmatprep.mubr.f32.mxu0 0.0
    %137 = vmatmul.mubr.f32.gmra.mxu0 %v67
    %v138 = vpop.f32.mrf.mxu0
    %v139 = vadd.f32 0.0, %v138
    %v140 = vpop.f32.mrf.mxu0
    %141 = vmatprep.mubr.f32.mxu0 0.0
    %142 = vmatmul.mubr.f32.gmra.mxu0 %v70
    %v143 = vpop.f32.mrf.mxu0
    %v144 = vadd.f32 0.0, %v143
    %v145 = vpop.f32.mrf.mxu0
    %146 = vdwg.mxu0
    %v147 = vadd.f32 %v57, %v139
    %v148 = vadd.f32 %v58, %v144
    %vm149 = vcmask 785408
    %150 = vst.msk [vmem:[#allocation2] sm:$0xff] %vm149, %v147
    %151 = vst.msk [vmem:[#allocation2 + $0x8] sm:$0xff] %vm149, %v148
    // Predicated region
    $region26: #{tpu_custom_call.1} parent=1 // pred_check
      %p152 = pneg %p43
    $region27: #{tpu_custom_call.1} parent=1 // pred_check_branch
      %154 = sbr.rel (%p152) target = $region29
    $region28: #{tpu_custom_call.1} parent=1 // pred_region
      %v155 = vld [vmem:[#allocation2] sm:$0xff]
      %v156 = vld [vmem:[#allocation2 + $0x8] sm:$0xff]
      %157 = vst.msk [vmem:[#allocation8] sm:$0xff] %vm149, %v155
      %158 = vst.msk [vmem:[#allocation8 + $0x8] sm:$0xff] %vm149, %v156
    $region29: #{tpu_custom_call.1} parent=1 // pred_fallthru
      _
    // Predicated region
    $region30: #{tpu_custom_call.1} parent=1 // pred_check
      _
    $region31: #{tpu_custom_call.1} parent=1 // pred_check_branch
      %160 = sbr.rel (0) target = $region33
    $region32: #{tpu_custom_call.1} parent=1 // pred_region
      %s162 = ssub.s32 256, 256
      %163 = vsyncadd [#allocation5], %s162
      %s164 = sshll.u32 [#allocation8], 4
      %s165 = int_to_ptr.vmem [resolvable:$true] %s164
      %170 = dma.vmem_to_hbm [thread:$0]  %s165, 256, %s3, [#allocation5], 128, 128, 8
    $region33: #{tpu_custom_call.1} parent=1 // pred_fallthru
      _
    // Predicated region
    $region34: #{tpu_custom_call.1} parent=1 // pred_check
      _
    $region35: #{tpu_custom_call.1} parent=1 // pred_check_branch
      %172 = sbr.rel (0) target = $region37
    $region36: #{tpu_custom_call.1} parent=1 // pred_region
      %173 = dma.done [#allocation5], 256
    $region37: #{tpu_custom_call.1} parent=1 // pred_fallthru
      _
    %174 = vsyncpa [#allocation4], 1
    %175 = vsyncpa [#allocation7], 1
    %176 = vsyncpa [#allocation5], 1

</llo_original>
